<compile_context>
chip_gen: v7x
topology: tpu7x:2x2x1
jax: 0.10.0
libtpu: 0.0.40
codegen_flags: <defaults>
</compile_context>

<pallas_src>
import functools

import jax
import jax.numpy as jnp
from jax import lax
from jax.experimental import pallas as pl
from jax.experimental.pallas import tpu as pltpu

LANE = 128
SUBLANE = 8
_EPS = 1e-5


def _round_up(x, m):
    return ((x + m - 1) // m) * m


def _vmem_capacity_bytes():
    """Physical per-TensorCore VMEM in bytes, or None if it cannot be queried."""
    try:
        cap = int(pltpu.get_tpu_info().vmem_capacity_bytes)
        if 16 * 1024 * 1024 <= cap <= 512 * 1024 * 1024:
            return cap
    except Exception:
        pass
    return None


def _compiler_params(dim_sem, vmem_cap):
    # ~85% of physical per-core VMEM (v5e/v6e: ~109 of 128 MiB, v7x: ~54 of
    # 64 MiB) leaves headroom for compiler scratch; if the capacity cannot be
    # queried, keep the compiler's default scoped limit.
    if vmem_cap is not None:
        return pltpu.CompilerParams(dimension_semantics=dim_sem,
                                    vmem_limit_bytes=int(vmem_cap * 0.85))
    return pltpu.CompilerParams(dimension_semantics=dim_sem)


def _conv_acc(w_ref, x_ref, start0, *, K, stride, tl, fuse):
    """One Conv1d output tile (tco, tl) in f32 via MXU matmul(s).

    Taps are sliced directly off the padded input ref (shift on the load
    path).  `start0` is the padded-input offset of output column 0 of this
    tile (static 0 for the resident path, dynamic for the Lout-tiled path).
    """
    taps = []
    for k in range(K):
        if stride == 1:
            sl = pl.ds(start0 + k, tl)
        else:
            # Strided read: the load does the striding (no lane gather).
            sl = pl.ds(start0 + k, tl, stride)
        taps.append(x_ref[0, :, sl])                        # (Ci, tl)
    if fuse:
        # Single (Ci*K)-deep contraction: better MXU depth utilization, no
        # per-tap accumulator adds / MRF pop passes.
        xcol = jnp.concatenate(taps, axis=0)                # (Ci*K, tl)
        return jnp.dot(w_ref[...], xcol, preferred_element_type=jnp.float32)
    acc = jnp.zeros((w_ref.shape[1], tl), jnp.float32)
    for k in range(K):
        acc = acc + jnp.dot(w_ref[k], taps[k],
                            preferred_element_type=jnp.float32)
    return acc


# ---------------------------------------------------------------------------
# Path A: resident-output kernel.  grid = (n_co, N); the (N, tco, Lout_p)
# output block stays in VMEM across the batch axis, BN is folded in place.
# ---------------------------------------------------------------------------
def _conv_bn_relu_resident_kernel(w_ref, x_ref, g_ref, b_ref, o_ref,
                                  sum_ref, sq_ref,
                                  *, K, stride, Lout, tl, fuse, inv_m):
    n = pl.program_id(1)

    @pl.when(n == 0)
    def _init():
        sum_ref[...] = jnp.zeros_like(sum_ref)
        sq_ref[...] = jnp.zeros_like(sq_ref)

    acc = _conv_acc(w_ref, x_ref, 0, K=K, stride=stride, tl=tl, fuse=fuse)

    # Mask the lane-padding tail (columns >= Lout) so BN statistics are exact
    # even when padding < K-1 (those columns overlap real input samples).
    if Lout < tl:
        col = lax.broadcasted_iota(jnp.int32, (1, tl), 1)
        acc_m = jnp.where(col < Lout, acc, 0.0)
    else:
        acc_m = acc
    sum_ref[...] += jnp.sum(acc_m, axis=1, keepdims=True)
    sq_ref[...] += jnp.sum(acc_m * acc_m, axis=1, keepdims=True)

    # Stash the pre-BN conv output for this batch row in the resident block.
    o_ref[n] = acc

    @pl.when(n == pl.num_programs(1) - 1)
    def _finalize():
        mean = sum_ref[...] * inv_m
        # One-pass (biased) variance; fine for typical conv outputs, a
        # two-pass fallback would be safer for channels with huge DC offsets.
        var = sq_ref[...] * inv_m - mean * mean
        scale = g_ref[...] * lax.rsqrt(var + _EPS)          # folded BN scale
        shift = b_ref[...] - mean * scale                   # folded BN shift
        nrows = o_ref.shape[0]

        def _row(i, carry):
            o_ref[i] = jnp.maximum(o_ref[i] * scale + shift, 0.0)
            return carry

        # Row-wise application bounds live vregs vs. one whole-block expr.
        lax.fori_loop(0, nrows, _row, 0, unroll=nrows <= 8)


# ---------------------------------------------------------------------------
# Path B (fallback for long L): kernel 1 = conv + masked stats, Lout tiled;
# kernel 2 = elementwise folded scale/shift + ReLU.
# ---------------------------------------------------------------------------
def _conv_stats_kernel(w_ref, x_ref, y_ref, sum_ref, sq_ref,
                       *, K, stride, Lout, tl, fuse):
    n = pl.program_id(1)
    l = pl.program_id(2)

    @pl.when((n == 0) & (l == 0))
    def _init():
        sum_ref[...] = jnp.zeros_like(sum_ref)
        sq_ref[...] = jnp.zeros_like(sq_ref)

    start0 = pl.multiple_of(l * (tl * stride), LANE)
    acc = _conv_acc(w_ref, x_ref, start0, K=K, stride=stride, tl=tl, fuse=fuse)

    col = l * tl + lax.broadcasted_iota(jnp.int32, (1, tl), 1)
    acc_m = jnp.where(col < Lout, acc, 0.0)
    sum_ref[...] += jnp.sum(acc_m, axis=1, keepdims=True)
    sq_ref[...] += jnp.sum(acc_m * acc_m, axis=1, keepdims=True)

    y_ref[0] = acc


def _bn_relu_apply_kernel(scale_ref, shift_ref, y_ref, o_ref):
    o_ref[...] = jnp.maximum(y_ref[...] * scale_ref[...] + shift_ref[...], 0.0)


# ---------------------------------------------------------------------------
# Wrapper
# ---------------------------------------------------------------------------
def _fits_resident(tco, N, Ci, K, Lout_p, stride, itemsize, budget):
    lpad = (Lout_p - 1) * stride + K
    out_b = 2 * N * tco * Lout_p * 4            # resident block + writeback slack
    x_b = 2 * Ci * lpad * itemsize              # double-buffered input row
    w_b = 2 * K * tco * Ci * itemsize
    return out_b + x_b + w_b + (1 << 16) <= budget


def _fits_tiled(tco, tl, Ci, K, Lout, stride, itemsize, budget):
    lout_pad = _round_up(Lout, tl)
    lpad = (lout_pad - 1) * stride + K
    x_b = 2 * Ci * lpad * itemsize
    y_b = 2 * tco * tl * 4
    w_b = 2 * K * tco * Ci * itemsize
    return x_b + y_b + w_b + (1 << 16) <= budget


def conv_block_forward(x, weight, bias, gamma, beta, *, stride, padding,
                       compute_dtype=None, force_lout_tiled=False,
                       max_tl=2048):
    """ConvBlock forward.  x: (N, Ci, L), weight: (Co, Ci, K) -> (N, Co, Lout).

    `bias` is accepted but unused: training-mode BatchNorm subtracts the
    per-channel batch mean right after the conv, so the bias cancels exactly.
    """
    del bias
    N, Ci, L = x.shape
    Co, ci_w, K = weight.shape
    assert ci_w == Ci
    Lout = (L + 2 * padding - K) // stride + 1
    assert Lout >= 1

    if compute_dtype is None:
        # Only cast when the caller asks (a standalone astype is an extra HBM
        # pass and negates the bf16 bandwidth win, especially on v5e).
        compute_dtype = x.dtype
    itemsize = jnp.dtype(compute_dtype).itemsize

    vmem_cap = _vmem_capacity_bytes()
    budget_base = vmem_cap if vmem_cap is not None else 128 * 1024 * 1024
    vmem_budget = int(budget_base * 0.70)
    small_vmem = vmem_cap is not None and vmem_cap <= 72 * 1024 * 1024  # v7x

    fuse = (Ci * K) <= 256
    Lout_p = _round_up(max(Lout, LANE), LANE)      # lane-dense (unmasked) stores
    Co_p = _round_up(Co, SUBLANE)

    # ---- co-tile selection (per generation) -------------------------------
    tco_max = 128 if small_vmem else 256           # never 256 on 64 MiB parts
    cands = [c for c in (256, 128, 64, 32, 16, 8) if c <= min(tco_max, Co_p)]
    if not cands:
        cands = [Co_p]
    if small_vmem and 16 <= Co_p <= 128:
        # v7x: make the 'parallel' co axis >= 2 wide so both TensorCores work.
        halved = [c for c in cands if c <= Co_p // 2]
        if halved:
            cands = halved

    tco_res = next((c for c in cands
                    if _fits_resident(c, N, Ci, K, Lout_p, stride, itemsize,
                                      vmem_budget)), None)
    use_resident = (tco_res is not None) and (not force_lout_tiled)

    if use_resident:
        tco = tco_res
        Lout_pad = Lout_p
        tl = Lout_pad
    else:
        tco = next((c for c in cands
                    if _fits_tiled(c, LANE, Ci, K, Lout, stride, itemsize,
                                   vmem_budget)), cands[-1])
        cap_tl = min(_round_up(Lout, LANE), _round_up(max(max_tl, LANE), LANE))
        tl = LANE
        for t in (2048, 1024, 512, 256, 128):
            if t <= cap_tl and _fits_tiled(tco, t, Ci, K, Lout, stride,
                                           itemsize, vmem_budget):
                tl = t
                break
        Lout_pad = _round_up(Lout, tl)

    Co_pad = _round_up(Co, tco)
    n_co = Co_pad // tco
    Lpad_total = max((Lout_pad - 1) * stride + K, L + padding)
    inv_m = 1.0 / float(N * Lout)

    # Cast (optional) + zero-pad as ONE fused XLA pass over x.
    # TODO(synk): fold the halo/zero padding into the kernel with boundary
    #             masking to remove this extra HBM read+write of x entirely.
    xp = jnp.pad(x.astype(compute_dtype),
                 ((0, 0), (0, 0), (padding, Lpad_total - L - padding)))

    if fuse:
        # w2[co, k*Ci + c] = weight[co, c, k]  -> one (tco, Ci*K) MXU operand.
        w = jnp.transpose(weight, (0, 2, 1)).reshape(Co, K * Ci)
        if Co_pad != Co:
            w = jnp.pad(w, ((0, Co_pad - Co), (0, 0)))
    else:
        w = jnp.transpose(weight, (2, 0, 1))       # (K, Co, Ci), tap-major
        if Co_pad != Co:
            w = jnp.pad(w, ((0, 0), (0, Co_pad - Co), (0, 0)))
    w = w.astype(compute_dtype)

    g_pad, b_pad = gamma, beta
    if Co_pad != Co:
        g_pad = jnp.pad(gamma, (0, Co_pad - Co), constant_values=1.0)
        b_pad = jnp.pad(beta, (0, Co_pad - Co))
    g_col = g_pad.reshape(Co_pad, 1).astype(jnp.float32)
    b_col = b_pad.reshape(Co_pad, 1).astype(jnp.float32)

    if use_resident:
        # ---- Path A: resident output, single fused kernel ------------------
        if fuse:
            w_spec = pl.BlockSpec((tco, K * Ci), lambda co, n: (co, 0))
        else:
            w_spec = pl.BlockSpec((K, tco, Ci), lambda co, n: (0, co, 0))
        x_spec = pl.BlockSpec((1, Ci, Lpad_total), lambda co, n: (n, 0, 0))
        # TODO(synk): if profiling shows the x DMA exposed (tiny Ci*K compute),
        #             add pipeline_mode=pl.Buffered(3) on x_spec (v5e/v6e).
        kernel = functools.partial(
            _conv_bn_relu_resident_kernel, K=K, stride=stride, Lout=Lout,
            tl=Lout_pad, fuse=fuse, inv_m=inv_m)
        out = pl.pallas_call(
            kernel,
            out_shape=jax.ShapeDtypeStruct((N, Co_pad, Lout_pad), jnp.float32),
            grid_spec=pltpu.PrefetchScalarGridSpec(
                num_scalar_prefetch=0,
                grid=(n_co, N),
                in_specs=[w_spec, x_spec,
                          pl.BlockSpec((tco, 1), lambda co, n: (co, 0)),
                          pl.BlockSpec((tco, 1), lambda co, n: (co, 0))],
                out_specs=pl.BlockSpec((N, tco, Lout_pad),
                                       lambda co, n: (0, co, 0)),
                scratch_shapes=[pltpu.VMEM((tco, 1), jnp.float32),
                                pltpu.VMEM((tco, 1), jnp.float32)]),
            compiler_params=_compiler_params(("parallel", "arbitrary"),
                                             vmem_cap),
        )(w, xp, g_col, b_col)
        return out[:, :Co, :Lout]

    # ---- Path B: Lout-tiled fallback (conv+stats, then scale/shift/ReLU) ---
    n_l = Lout_pad // tl
    if fuse:
        w_spec = pl.BlockSpec((tco, K * Ci), lambda co, n, l: (co, 0))
    else:
        w_spec = pl.BlockSpec((K, tco, Ci), lambda co, n, l: (0, co, 0))
    x_spec = pl.BlockSpec((1, Ci, Lpad_total), lambda co, n, l: (n, 0, 0))
    # TODO(synk): for extreme L where even one (Ci, Lpad_total) row does not
    #             fit VMEM, switch x to memory_space=pl.ANY + manual halo DMA.
    kernel1 = functools.partial(_conv_stats_kernel, K=K, stride=stride,
                                Lout=Lout, tl=tl, fuse=fuse)
    y_pre, s1, s2 = pl.pallas_call(
        kernel1,
        out_shape=(jax.ShapeDtypeStruct((N, Co_pad, Lout_pad), jnp.float32),
                   jax.ShapeDtypeStruct((Co_pad, 1), jnp.float32),
                   jax.ShapeDtypeStruct((Co_pad, 1), jnp.float32)),
        grid_spec=pltpu.PrefetchScalarGridSpec(
            num_scalar_prefetch=0,
            grid=(n_co, N, n_l),
            in_specs=[w_spec, x_spec],
            out_specs=[
                pl.BlockSpec((1, tco, tl), lambda co, n, l: (n, co, l)),
                pl.BlockSpec((tco, 1), lambda co, n, l: (co, 0)),
                pl.BlockSpec((tco, 1), lambda co, n, l: (co, 0))]),
        compiler_params=_compiler_params(
            ("parallel", "arbitrary", "arbitrary"), vmem_cap),
    )(w, xp)

    # Fold BN into a per-channel FMA (tiny (Co,1) math in plain JAX).
    mean = s1 * inv_m
    var = s2 * inv_m - mean * mean
    scale = g_col * lax.rsqrt(var + _EPS)
    shift = b_col - mean * scale

    out = pl.pallas_call(
        _bn_relu_apply_kernel,
        out_shape=jax.ShapeDtypeStruct((N, Co_pad, Lout_pad), jnp.float32),
        grid_spec=pltpu.PrefetchScalarGridSpec(
            num_scalar_prefetch=0,
            grid=(n_co, N, n_l),
            in_specs=[pl.BlockSpec((tco, 1), lambda co, n, l: (co, 0)),
                      pl.BlockSpec((tco, 1), lambda co, n, l: (co, 0)),
                      pl.BlockSpec((1, tco, tl), lambda co, n, l: (n, co, l))],
            out_specs=pl.BlockSpec((1, tco, tl), lambda co, n, l: (n, co, l))),
        compiler_params=_compiler_params(
            ("parallel", "parallel", "parallel"), vmem_cap),
    )(scale, shift, y_pre)
    return out[:, :Co, :Lout]


def reference_forward(x, weight, bias, gamma, beta, *, stride, padding):
    """Pure-JAX reference: Conv1d + bias + training-mode BN + ReLU."""
    y = lax.conv_general_dilated(
        x, weight, window_strides=(stride,), padding=[(padding, padding)],
        dimension_numbers=("NCH", "OIH", "NCH"),
        precision=lax.Precision.HIGHEST)
    y = y + bias.reshape(1, -1, 1)
    mean = jnp.mean(y, axis=(0, 2), keepdims=True)
    var = jnp.mean((y - mean) ** 2, axis=(0, 2), keepdims=True)
    y = (y - mean) / jnp.sqrt(var + _EPS)
    y = gamma.reshape(1, -1, 1) * y + beta.reshape(1, -1, 1)
    return jnp.maximum(y, 0.0)


if __name__ == "__main__":
    def run_case(name, *, N, Ci, L, Co, K, stride, padding, atol,
                 compute_dtype=None, force_lout_tiled=False, max_tl=2048):
        key = jax.random.PRNGKey(0)
        kx, kw, kb, kg, kbe = jax.random.split(key, 5)
        x = jax.random.normal(kx, (N, Ci, L), dtype=jnp.float32)
        weight = jax.random.normal(kw, (Co, Ci, K), dtype=jnp.float32) * 0.1
        bias = jax.random.normal(kb, (Co,), dtype=jnp.float32) * 0.1
        gamma = 1.0 + 0.1 * jax.random.normal(kg, (Co,), dtype=jnp.float32)
        beta = 0.1 * jax.random.normal(kbe, (Co,), dtype=jnp.float32)

        ref = reference_forward(x, weight, bias, gamma, beta,
                                stride=stride, padding=padding)
        out = conv_block_forward(x, weight, bias, gamma, beta,
                                 stride=stride, padding=padding,
                                 compute_dtype=compute_dtype,
                                 force_lout_tiled=force_lout_tiled,
                                 max_tl=max_tl)
        out = jax.block_until_ready(out)
        assert out.shape == ref.shape, (name, out.shape, ref.shape)
        err = float(jnp.max(jnp.abs(out - ref)))
        assert err <= atol, (name, err)

    # ConvBlock(4, 8, kernel_size=3, stride=1, padding=1) — the module config.
    run_case("same_pad_f32", N=2, Ci=4, L=16, Co=8, K=3, stride=1, padding=1,
             atol=2e-3)
    # Odd channel counts + larger kernel: exercises channel padding & masking.
    run_case("k5_p2_f32", N=3, Ci=7, L=20, Co=12, K=5, stride=1, padding=2,
             atol=2e-3)
    # Force the Lout-tiled fallback path (L tiled into 128-wide blocks).
    run_case("lout_tiled_f32", N=2, Ci=4, L=300, Co=8, K=3, stride=1,
             padding=1, atol=2e-3, force_lout_tiled=True, max_tl=128)
    # bf16 matmul inputs (f32 accumulation / statistics / normalization).
    run_case("same_pad_bf16", N=2, Ci=4, L=16, Co=8, K=3, stride=1, padding=1,
             atol=6e-2, compute_dtype=jnp.bfloat16)

    print("KERNEL_OK")
</pallas_src>

<mosaic_0001>
module attributes {stable_mosaic.version = 11 : i64} {
  func.func @_conv_bn_relu_resident_kernel(%arg0: i32, %arg1: i32, %arg2: memref<8x12xf32, #tpu.memory_space<vmem>>, %arg3: memref<1x4x130xf32, #tpu.memory_space<vmem>>, %arg4: memref<8x1xf32, #tpu.memory_space<vmem>>, %arg5: memref<8x1xf32, #tpu.memory_space<vmem>>, %arg6: memref<2x8x128xf32, #tpu.memory_space<vmem>>, %arg7: memref<8x1xf32, #tpu.memory_space<vmem>>, %arg8: memref<8x1xf32, #tpu.memory_space<vmem>>) attributes {dimension_semantics = [#tpu.dimension_semantics<parallel>, #tpu.dimension_semantics<arbitrary>], iteration_bounds = array<i64: 1, 2>, scalar_prefetch = 0 : i64, scratch_operands = 2 : i64, tpu.core_type = #tpu.core_type<tc>, window_params = [{transform_indices = @transform_0, window_bounds = array<i64: 8, 12>}, {transform_indices = @transform_1, window_bounds = array<i64: 1, 4, 130>}, {transform_indices = @transform_2, window_bounds = array<i64: 8, 1>}, {transform_indices = @transform_3, window_bounds = array<i64: 8, 1>}, {transform_indices = @transform_4, window_bounds = array<i64: 2, 8, 128>}]} {
    %c0_i32 = arith.constant 0 : i32
    %0 = arith.cmpi eq, %arg1, %c0_i32 : i32
    %1 = arith.extui %0 : i1 to i32
    %c0_i32_0 = arith.constant 0 : i32
    %2 = arith.cmpi ne, %1, %c0_i32_0 : i32
    scf.if %2 {
      %cst_23 = arith.constant 0.000000e+00 : f32
      %37 = vector.broadcast %cst_23 : f32 to vector<8x1xf32>
      %c0_24 = arith.constant 0 : index
      %c0_25 = arith.constant 0 : index
      %38 = vector.load %arg7[%c0_24, %c0_25] : memref<8x1xf32, #tpu.memory_space<vmem>>, vector<8x1xf32>
      tpu.vector_store %arg7[%c0_24, %c0_25], %37 {strides = array<i32>} : memref<8x1xf32, #tpu.memory_space<vmem>>, vector<8x1xf32>,
      %cst_26 = arith.constant 0.000000e+00 : f32
      %39 = vector.broadcast %cst_26 : f32 to vector<8x1xf32>
      %c0_27 = arith.constant 0 : index
      %c0_28 = arith.constant 0 : index
      %40 = vector.load %arg8[%c0_27, %c0_28] : memref<8x1xf32, #tpu.memory_space<vmem>>, vector<8x1xf32>
      tpu.vector_store %arg8[%c0_27, %c0_28], %39 {strides = array<i32>} : memref<8x1xf32, #tpu.memory_space<vmem>>, vector<8x1xf32>,
    } else {
    }
    %c0 = arith.constant 0 : index
    %c0_1 = arith.constant 0 : index
    %c0_2 = arith.constant 0 : index
    %3 = vector.load %arg3[%c0, %c0_1, %c0_2] : memref<1x4x130xf32, #tpu.memory_space<vmem>>, vector<1x4x128xf32>
    %4 = vector.shape_cast %3 : vector<1x4x128xf32> to vector<4x128xf32>
    %c0_3 = arith.constant 0 : index
    %c0_4 = arith.constant 0 : index
    %c1 = arith.constant 1 : index
    %5 = vector.load %arg3[%c0_3, %c0_4, %c1] : memref<1x4x130xf32, #tpu.memory_space<vmem>>, vector<1x4x128xf32>
    %6 = vector.shape_cast %5 : vector<1x4x128xf32> to vector<4x128xf32>
    %c0_5 = arith.constant 0 : index
    %c0_6 = arith.constant 0 : index
    %c2 = arith.constant 2 : index
    %7 = vector.load %arg3[%c0_5, %c0_6, %c2] : memref<1x4x130xf32, #tpu.memory_space<vmem>>, vector<1x4x128xf32>
    %8 = vector.shape_cast %7 : vector<1x4x128xf32> to vector<4x128xf32>
    %9 = tpu.concatenate %4, %6, %8 in 0 : vector<4x128xf32>, vector<4x128xf32>, vector<4x128xf32> -> vector<12x128xf32>
    %c0_7 = arith.constant 0 : index
    %c0_8 = arith.constant 0 : index
    %10 = vector.load %arg2[%c0_7, %c0_8] : memref<8x12xf32, #tpu.memory_space<vmem>>, vector<8x12xf32>
    %cst = arith.constant dense<0.000000e+00> : vector<8x128xf32>
    %11 = tpu.matmul %10, %9, %cst {dimension_numbers = #tpu.dot_dimension_numbers<[1], [0], [0], [1], [0, 0, 1, 1], [], []>} : vector<8x12xf32>, vector<12x128xf32>, vector<8x128xf32> -> vector<8x128xf32>
    %12 = tpu.iota {dimensions = array<i32: 1>} : vector<1x128xi32>
    %c16_i32 = arith.constant 16 : i32
    %13 = vector.broadcast %c16_i32 : i32 to vector<1x128xi32>
    %14 = arith.cmpi slt, %12, %13 : vector<1x128xi32>
    %cst_9 = arith.constant 0.000000e+00 : f32
    %15 = vector.shape_cast %14 : vector<1x128xi1> to vector<1x128xi1>
    %16 = vector.broadcast %15 : vector<1x128xi1> to vector<8x128xi1>
    %17 = vector.broadcast %cst_9 : f32 to vector<8x128xf32>
    %18 = arith.select %16, %11, %17 : vector<8x128xi1>, vector<8x128xf32>
    %c0_10 = arith.constant 0 : index
    %c0_11 = arith.constant 0 : index
    %19 = vector.load %arg7[%c0_10, %c0_11] : memref<8x1xf32, #tpu.memory_space<vmem>>, vector<8x1xf32>
    %cst_12 = arith.constant dense<0.000000e+00> : vector<8xf32>
    %20 = vector.multi_reduction <add>, %18, %cst_12 [1] : vector<8x128xf32> to vector<8xf32>
    %21 = vector.shape_cast %20 : vector<8xf32> to vector<8x1xf32>
    %22 = arith.addf %19, %21 : vector<8x1xf32>
    %c0_13 = arith.constant 0 : index
    %c0_14 = arith.constant 0 : index
    %23 = vector.load %arg7[%c0_13, %c0_14] : memref<8x1xf32, #tpu.memory_space<vmem>>, vector<8x1xf32>
    tpu.vector_store %arg7[%c0_13, %c0_14], %22 {strides = array<i32>} : memref<8x1xf32, #tpu.memory_space<vmem>>, vector<8x1xf32>,
    %c0_15 = arith.constant 0 : index
    %c0_16 = arith.constant 0 : index
    %24 = vector.load %arg8[%c0_15, %c0_16] : memref<8x1xf32, #tpu.memory_space<vmem>>, vector<8x1xf32>
    %25 = arith.mulf %18, %18 : vector<8x128xf32>
    %cst_17 = arith.constant dense<0.000000e+00> : vector<8xf32>
    %26 = vector.multi_reduction <add>, %25, %cst_17 [1] : vector<8x128xf32> to vector<8xf32>
    %27 = vector.shape_cast %26 : vector<8xf32> to vector<8x1xf32>
    %28 = arith.addf %24, %27 : vector<8x1xf32>
    %c0_18 = arith.constant 0 : index
    %c0_19 = arith.constant 0 : index
    %29 = vector.load %arg8[%c0_18, %c0_19] : memref<8x1xf32, #tpu.memory_space<vmem>>, vector<8x1xf32>
    tpu.vector_store %arg8[%c0_18, %c0_19], %28 {strides = array<i32>} : memref<8x1xf32, #tpu.memory_space<vmem>>, vector<8x1xf32>,
    %30 = arith.index_cast %arg1 : i32 to index
    %c0_20 = arith.constant 0 : index
    %c0_21 = arith.constant 0 : index
    %31 = vector.load %arg6[%30, %c0_20, %c0_21] : memref<2x8x128xf32, #tpu.memory_space<vmem>>, vector<1x8x128xf32>
    %32 = vector.shape_cast %31 : vector<1x8x128xf32> to vector<8x128xf32>
    %33 = vector.shape_cast %11 : vector<8x128xf32> to vector<1x8x128xf32>
    tpu.vector_store %arg6[%30, %c0_20, %c0_21], %33 {strides = array<i32>} : memref<2x8x128xf32, #tpu.memory_space<vmem>>, vector<1x8x128xf32>,
    %c1_i32 = arith.constant 1 : i32
    %34 = arith.cmpi eq, %arg1, %c1_i32 : i32
    %35 = arith.extui %34 : i1 to i32
    %c0_i32_22 = arith.constant 0 : i32
    %36 = arith.cmpi ne, %35, %c0_i32_22 : i32
    scf.if %36 {
      %c0_23 = arith.constant 0 : index
      %c0_24 = arith.constant 0 : index
      %37 = vector.load %arg7[%c0_23, %c0_24] : memref<8x1xf32, #tpu.memory_space<vmem>>, vector<8x1xf32>
      %cst_25 = arith.constant 3.125000e-02 : f32
      %38 = vector.broadcast %cst_25 : f32 to vector<8x1xf32>
      %39 = arith.mulf %37, %38 : vector<8x1xf32>
      %c0_26 = arith.constant 0 : index
      %c0_27 = arith.constant 0 : index
      %40 = vector.load %arg8[%c0_26, %c0_27] : memref<8x1xf32, #tpu.memory_space<vmem>>, vector<8x1xf32>
      %cst_28 = arith.constant 3.125000e-02 : f32
      %41 = vector.broadcast %cst_28 : f32 to vector<8x1xf32>
      %42 = arith.mulf %40, %41 : vector<8x1xf32>
      %43 = arith.mulf %39, %39 : vector<8x1xf32>
      %44 = arith.subf %42, %43 : vector<8x1xf32>
      %c0_29 = arith.constant 0 : index
      %c0_30 = arith.constant 0 : index
      %45 = vector.load %arg4[%c0_29, %c0_30] : memref<8x1xf32, #tpu.memory_space<vmem>>, vector<8x1xf32>
      %cst_31 = arith.constant 9.99999974E-6 : f32
      %46 = vector.broadcast %cst_31 : f32 to vector<8x1xf32>
      %47 = arith.addf %44, %46 : vector<8x1xf32>
      %48 = math.rsqrt %47 : vector<8x1xf32>
      %49 = arith.mulf %45, %48 : vector<8x1xf32>
      %c0_32 = arith.constant 0 : index
      %c0_33 = arith.constant 0 : index
      %50 = vector.load %arg5[%c0_32, %c0_33] : memref<8x1xf32, #tpu.memory_space<vmem>>, vector<8x1xf32>
      %51 = arith.mulf %39, %49 : vector<8x1xf32>
      %52 = arith.subf %50, %51 : vector<8x1xf32>
      %c0_i32_34 = arith.constant 0 : i32
      %53 = arith.index_cast %c0_i32_34 : i32 to index
      %c0_35 = arith.constant 0 : index
      %c0_36 = arith.constant 0 : index
      %54 = vector.load %arg6[%53, %c0_35, %c0_36] : memref<2x8x128xf32, #tpu.memory_space<vmem>>, vector<1x8x128xf32>
      %55 = vector.shape_cast %54 : vector<1x8x128xf32> to vector<8x128xf32>
      %56 = vector.broadcast %49 : vector<8x1xf32> to vector<8x128xf32>
      %57 = arith.mulf %55, %56 : vector<8x128xf32>
      %58 = vector.broadcast %52 : vector<8x1xf32> to vector<8x128xf32>
      %59 = arith.addf %57, %58 : vector<8x128xf32>
      %cst_37 = arith.constant 0.000000e+00 : f32
      %60 = vector.broadcast %cst_37 : f32 to vector<8x128xf32>
      %61 = arith.maximumf %59, %60 : vector<8x128xf32>
      %62 = arith.index_cast %c0_i32_34 : i32 to index
      %c0_38 = arith.constant 0 : index
      %c0_39 = arith.constant 0 : index
      %63 = vector.load %arg6[%62, %c0_38, %c0_39] : memref<2x8x128xf32, #tpu.memory_space<vmem>>, vector<1x8x128xf32>
      %64 = vector.shape_cast %63 : vector<1x8x128xf32> to vector<8x128xf32>
      %65 = vector.shape_cast %61 : vector<8x128xf32> to vector<1x8x128xf32>
      tpu.vector_store %arg6[%62, %c0_38, %c0_39], %65 {strides = array<i32>} : memref<2x8x128xf32, #tpu.memory_space<vmem>>, vector<1x8x128xf32>,
      %c1_i32_40 = arith.constant 1 : i32
      %66 = arith.index_cast %c1_i32_40 : i32 to index
      %c0_41 = arith.constant 0 : index
      %c0_42 = arith.constant 0 : index
      %67 = vector.load %arg6[%66, %c0_41, %c0_42] : memref<2x8x128xf32, #tpu.memory_space<vmem>>, vector<1x8x128xf32>
      %68 = vector.shape_cast %67 : vector<1x8x128xf32> to vector<8x128xf32>
      %69 = vector.broadcast %49 : vector<8x1xf32> to vector<8x128xf32>
      %70 = arith.mulf %68, %69 : vector<8x128xf32>
      %71 = vector.broadcast %52 : vector<8x1xf32> to vector<8x128xf32>
      %72 = arith.addf %70, %71 : vector<8x128xf32>
      %cst_43 = arith.constant 0.000000e+00 : f32
      %73 = vector.broadcast %cst_43 : f32 to vector<8x128xf32>
      %74 = arith.maximumf %72, %73 : vector<8x128xf32>
      %75 = arith.index_cast %c1_i32_40 : i32 to index
      %c0_44 = arith.constant 0 : index
      %c0_45 = arith.constant 0 : index
      %76 = vector.load %arg6[%75, %c0_44, %c0_45] : memref<2x8x128xf32, #tpu.memory_space<vmem>>, vector<1x8x128xf32>
      %77 = vector.shape_cast %76 : vector<1x8x128xf32> to vector<8x128xf32>
      %78 = vector.shape_cast %74 : vector<8x128xf32> to vector<1x8x128xf32>
      tpu.vector_store %arg6[%75, %c0_44, %c0_45], %78 {strides = array<i32>} : memref<2x8x128xf32, #tpu.memory_space<vmem>>, vector<1x8x128xf32>,
      %c2_i32 = arith.constant 2 : i32
    } else {
    }
    return
  }
  func.func @transform_0(%arg0: i32, %arg1: i32) -> (i32, i32) {
    %c0_i32 = arith.constant 0 : i32
    %c0_i32_0 = arith.constant 0 : i32
    return %arg0, %c0_i32 : i32, i32
  }
  func.func @transform_1(%arg0: i32, %arg1: i32) -> (i32, i32, i32) {
    %c0_i32 = arith.constant 0 : i32
    %c0_i32_0 = arith.constant 0 : i32
    %c0_i32_1 = arith.constant 0 : i32
    return %arg1, %c0_i32, %c0_i32_0 : i32, i32, i32
  }
  func.func @transform_2(%arg0: i32, %arg1: i32) -> (i32, i32) {
    %c0_i32 = arith.constant 0 : i32
    %c0_i32_0 = arith.constant 0 : i32
    return %arg0, %c0_i32 : i32, i32
  }
  func.func @transform_3(%arg0: i32, %arg1: i32) -> (i32, i32) {
    %c0_i32 = arith.constant 0 : i32
    %c0_i32_0 = arith.constant 0 : i32
    return %arg0, %c0_i32 : i32, i32
  }
  func.func @transform_4(%arg0: i32, %arg1: i32) -> (i32, i32, i32) {
    %c0_i32 = arith.constant 0 : i32
    %c0_i32_0 = arith.constant 0 : i32
    %c0_i32_1 = arith.constant 0 : i32
    return %c0_i32, %arg0, %c0_i32_0 : i32, i32, i32
  }
}

</mosaic_0001>

<llo_original>
// kernel: tpu_custom_call.1
$region0: #{tpu_custom_call.1}
  #allocation0 [shape = 'u32[]', space=smem, size = 0x4, offset = 0x4, fixed_abs, tag = 'smem constant byte address 0x4 - core index']
  #allocation1 [shape = 'u32[144,128]{1,0:T(1,128)}', space=vmem, size = 0x12000, scoped, tag = 'internal scratch']
  #allocation2 [shape = 'f32[8,1]{1,0:T(8,128)}', space=vmem, size = 0x1000, scoped, tag = 'scratch operand']
  #allocation3 [shape = 'f32[8,1]{1,0:T(8,128)}', space=vmem, size = 0x1000, scoped, tag = 'scratch operand']
  %s0 = inlined_call_operand.hbm [shape: f32[8,12], index: 0, kind: input, shape index: {}]
  %s1 = inlined_call_operand.vmem [shape: f32[2,4,130], index: 1, kind: input, shape index: {}]
  %s2 = inlined_call_operand.vmem [shape: f32[8,1], index: 2, kind: input, shape index: {}]
  %s3 = inlined_call_operand.vmem [shape: f32[8,1], index: 3, kind: input, shape index: {}]
  %s4 = inlined_call_operand.hbm [shape: f32[2,8,128], index: 4, kind: output, shape index: {}]
  %s5 = sld [smem:[#allocation0]]
  $region61: #{tpu_custom_call.1} parent=0
    _
  %s7 = ssub.s32 1, %s5
  %s8 = scalar_select 0, %s7, %s5
  $region1: #{tpu_custom_call.1} parent=0
    #allocation4 [shape = 'u8[4096]{0}', space=vmem, size = 0x1000, scoped, tag = 'input window, operand 0, single buffered']
    #allocation5 [shape = 's32[2]{0}', space=sflag, size = 0x8, scoped, tag = 'scoped memory for tpu_custom_call.1']
    #allocation6 [shape = 's32[2]{0}', space=sflag, size = 0x8, scoped, tag = 'scoped memory for tpu_custom_call.1']
    #allocation7 [shape = 'u8[8192]{0}', space=vmem, size = 0x2000, scoped, tag = 'output window, operand 0, single buffered']
    %9 = vsyncpa [#allocation5], 0
    %10 = vsyncpa [#allocation6], 0
    loop: start=0, step=1, limit=4
    $region2: #{tpu_custom_call.1} parent=1 // loop_pre_header
      _
    $region3: #{tpu_custom_call.1} parent=1 // loop_header
      %s12 = sphi 0, %s16
      %p13 = scmp.ge.s32.totalorder %s12, 4
      %s19 = sphi 0, %s31
      %s20 = sphi 0, %s27
      %s21 = sphi 0, %s19
      %s22 = sphi 0, %s20
      %s23 = sphi 0, %s21
      %s24 = sphi 0, %s22
      %s34 = sphi 0, %s36
      %s37 = sphi 0, %s34
      %s38 = sphi 0, %s37
      %s54 = sphi 0, %s38
      %s60 = sphi 0, %s62
      %s63 = sphi 0, %s60
      %s64 = sphi 0, %s63
      %s80 = sphi 0, %s64
      %s86 = sphi 0, %s88
      %s89 = sphi 0, %s86
      %s90 = sphi 0, %s89
      %s106 = sphi 0, %s90
      %s112 = sphi 0, %s114
      %s115 = sphi 0, %s112
      %s116 = sphi 0, %s115
      %s132 = sphi 0, %s116
      %s138 = sphi 0, %s140
      %s141 = sphi 0, %s138
      %s142 = sphi 0, %s141
      %s158 = sphi 0, %s142
    $region4: #{tpu_custom_call.1} parent=1 // loop_header_branch
      %15 = sbr.rel (%p13) target = $region8
    $region5: #{tpu_custom_call.1} parent=1 // loop_body
      %s17 = ssub.s32 %s12, 1
      %s18 = ssub.s32 %s12, 2
      %s25 = sadd.s32 1, %s20
      %p26 = scmp.ge.s32.totalorder %s25, 2
      %s27 = scalar_select %p26, 0, %s25
      %s28 = sadd.s32 1, %s19
      %s29 = scalar_select %p26, %s28, %s19
      %p30 = scmp.ge.s32.totalorder %s29, 1
      %s31 = scalar_select %p30, 0, %s29
      %s32 = ssub.s32 %s19, %s31
      %p33 = scmp.eq.s32.totalorder %s32, 0
      %s35 = sadd.s32 %s34, 1
      %s36 = scalar_select %p33, %s34, %s35
      %p39 = pneg %p33
      %p40 = scmp.eq.s32.totalorder %s12, 1
      %p41 = por %p39, %p40
      %p42 = scmp.ne.s32.totalorder %s34, %s37
      %p43 = scmp.eq.s32.totalorder %s12, 0
      %p44 = por %p42, %p43
      %p45 = scmp.ne.s32.totalorder %s34, %s37
      %p46 = scmp.eq.s32.totalorder %s17, 1
      %p47 = por %p45, %p46
      %p48 = scmp.ne.s32.totalorder %s37, %s38
      %p49 = scmp.eq.s32.totalorder %s17, 0
      %p50 = por %p48, %p49
      %p51 = scmp.ne.s32.totalorder %s37, %s38
      %p52 = scmp.eq.s32.totalorder %s18, 1
      %p53 = por %p51, %p52
      %p55 = scmp.ne.s32.totalorder %s38, %s54
      %p56 = scmp.eq.s32.totalorder %s18, 0
      %p57 = por %p55, %p56
      %s58 = ssub.s32 %s20, %s27
      %p59 = scmp.eq.s32.totalorder %s58, 0
      %s61 = sadd.s32 %s60, 1
      %s62 = scalar_select %p59, %s60, %s61
      %p65 = pneg %p59
      %p66 = scmp.eq.s32.totalorder %s12, 1
      %p67 = por %p65, %p66
      %p68 = scmp.ne.s32.totalorder %s60, %s63
      %p69 = scmp.eq.s32.totalorder %s12, 0
      %p70 = por %p68, %p69
      %p71 = scmp.ne.s32.totalorder %s60, %s63
      %p72 = scmp.eq.s32.totalorder %s17, 1
      %p73 = por %p71, %p72
      %p74 = scmp.ne.s32.totalorder %s63, %s64
      %p75 = scmp.eq.s32.totalorder %s17, 0
      %p76 = por %p74, %p75
      %p77 = scmp.ne.s32.totalorder %s63, %s64
      %p78 = scmp.eq.s32.totalorder %s18, 1
      %p79 = por %p77, %p78
      %p81 = scmp.ne.s32.totalorder %s64, %s80
      %p82 = scmp.eq.s32.totalorder %s18, 0
      %p83 = por %p81, %p82
      %s84 = ssub.s32 %s19, %s31
      %p85 = scmp.eq.s32.totalorder %s84, 0
      %s87 = sadd.s32 %s86, 1
      %s88 = scalar_select %p85, %s86, %s87
      %p91 = pneg %p85
      %p92 = scmp.eq.s32.totalorder %s12, 1
      %p93 = por %p91, %p92
      %p94 = scmp.ne.s32.totalorder %s86, %s89
      %p95 = scmp.eq.s32.totalorder %s12, 0
      %p96 = por %p94, %p95
      %p97 = scmp.ne.s32.totalorder %s86, %s89
      %p98 = scmp.eq.s32.totalorder %s17, 1
      %p99 = por %p97, %p98
      %p100 = scmp.ne.s32.totalorder %s89, %s90
      %p101 = scmp.eq.s32.totalorder %s17, 0
      %p102 = por %p100, %p101
      %p103 = scmp.ne.s32.totalorder %s89, %s90
      %p104 = scmp.eq.s32.totalorder %s18, 1
      %p105 = por %p103, %p104
      %p107 = scmp.ne.s32.totalorder %s90, %s106
      %p108 = scmp.eq.s32.totalorder %s18, 0
      %p109 = por %p107, %p108
      %s110 = ssub.s32 %s19, %s31
      %p111 = scmp.eq.s32.totalorder %s110, 0
      %s113 = sadd.s32 %s112, 1
      %s114 = scalar_select %p111, %s112, %s113
      %p117 = pneg %p111
      %p118 = scmp.eq.s32.totalorder %s12, 1
      %p119 = por %p117, %p118
      %p120 = scmp.ne.s32.totalorder %s112, %s115
      %p121 = scmp.eq.s32.totalorder %s12, 0
      %p122 = por %p120, %p121
      %p123 = scmp.ne.s32.totalorder %s112, %s115
      %p124 = scmp.eq.s32.totalorder %s17, 1
      %p125 = por %p123, %p124
      %p126 = scmp.ne.s32.totalorder %s115, %s116
      %p127 = scmp.eq.s32.totalorder %s17, 0
      %p128 = por %p126, %p127
      %p129 = scmp.ne.s32.totalorder %s115, %s116
      %p130 = scmp.eq.s32.totalorder %s18, 1
      %p131 = por %p129, %p130
      %p133 = scmp.ne.s32.totalorder %s116, %s132
      %p134 = scmp.eq.s32.totalorder %s18, 0
      %p135 = por %p133, %p134
      %s136 = ssub.s32 %s19, %s31
      %p137 = scmp.eq.s32.totalorder %s136, 0
      %s139 = sadd.s32 %s138, 1
      %s140 = scalar_select %p137, %s138, %s139
      %p143 = pneg %p137
      %p144 = scmp.eq.s32.totalorder %s12, 1
      %p145 = por %p143, %p144
      %p146 = scmp.ne.s32.totalorder %s138, %s141
      %p147 = scmp.eq.s32.totalorder %s12, 0
      %p148 = por %p146, %p147
      %p149 = scmp.ne.s32.totalorder %s138, %s141
      %p150 = scmp.eq.s32.totalorder %s17, 1
      %p151 = por %p149, %p150
      %p152 = scmp.ne.s32.totalorder %s141, %s142
      %p153 = scmp.eq.s32.totalorder %s17, 0
      %p154 = por %p152, %p153
      %p155 = scmp.ne.s32.totalorder %s141, %s142
      %p156 = scmp.eq.s32.totalorder %s18, 1
      %p157 = por %p155, %p156
      %p159 = scmp.ne.s32.totalorder %s142, %s158
      %p160 = scmp.eq.s32.totalorder %s18, 0
      %p161 = por %p159, %p160
      %p162 = scmp.le.s32.totalorder 1, %s12
      %p163 = scmp.lt.s32.totalorder %s12, 3
      %p164 = pnand %p162, %p163
      %p165 = pneg %p164
      // Predicated region
      $region9: #{tpu_custom_call.1} parent=5 // pred_check
        _
      $region10: #{tpu_custom_call.1} parent=5 // pred_check_branch
        %167 = sbr.rel (%p164) target = $region12
      $region11: #{tpu_custom_call.1} parent=5 // pred_region
        %s168 = ssub.s32 %s12, 1
        // Predicated region
        $region13: #{tpu_custom_call.1} parent=11 // pred_check
          %p169 = pneg %p50
        $region14: #{tpu_custom_call.1} parent=11 // pred_check_branch
          %171 = sbr.rel (%p169) target = $region16
        $region15: #{tpu_custom_call.1} parent=11 // pred_region
          %s173 = ssub.s32 128, 128
          %174 = vsyncadd [#allocation5], %s173
          %s175 = smul.addr %s21, 128
          %s176 = scalar_lea.hbm %s0, %s175
          %s178 = sshll.u32 [#allocation4], 4
          %s179 = int_to_ptr.vmem [resolvable:$true] %s178
          %181 = dma.hbm_to_vmem [thread:$0]  %s176, 128, %s179, [#allocation5]
        $region16: #{tpu_custom_call.1} parent=11 // pred_fallthru
          _
        // Predicated region
        $region17: #{tpu_custom_call.1} parent=11 // pred_check
          %p182 = pneg %p102
        $region18: #{tpu_custom_call.1} parent=11 // pred_check_branch
          %184 = sbr.rel (%p182) target = $region20
        $region19: #{tpu_custom_call.1} parent=11 // pred_region
          %p185 = scmp.lt.s32.totalorder %s21, 0
          %s186 = scalar_select %p185, %s21, 0
          %s187 = smul.addr %s186, 8
          %s188 = scalar_lea.vmem %s2, %s187
        $region20: #{tpu_custom_call.1} parent=11 // pred_fallthru
          _
        // Predicated region
        $region21: #{tpu_custom_call.1} parent=11 // pred_check
          %p189 = pneg %p128
        $region22: #{tpu_custom_call.1} parent=11 // pred_check_branch
          %191 = sbr.rel (%p189) target = $region24
        $region23: #{tpu_custom_call.1} parent=11 // pred_region
          %p192 = scmp.lt.s32.totalorder %s21, 0
          %s193 = scalar_select %p192, %s21, 0
          %s194 = smul.addr %s193, 8
          %s195 = scalar_lea.vmem %s3, %s194
        $region24: #{tpu_custom_call.1} parent=11 // pred_fallthru
          _
      $region12: #{tpu_custom_call.1} parent=5 // pred_fallthru
        _
      %p196 = scmp.lt.s32.totalorder %s12, 2
      // Predicated region
      $region25: #{tpu_custom_call.1} parent=5 // pred_check
        %p197 = pneg %p196
      $region26: #{tpu_custom_call.1} parent=5 // pred_check_branch
        %199 = sbr.rel (%p197) target = $region28
      $region27: #{tpu_custom_call.1} parent=5 // pred_region
        // Predicated region
        $region29: #{tpu_custom_call.1} parent=27 // pred_check
          %p200 = pneg %p70
        $region30: #{tpu_custom_call.1} parent=27 // pred_check_branch
          %202 = sbr.rel (%p200) target = $region32
        $region31: #{tpu_custom_call.1} parent=27 // pred_region
          %p203 = scmp.lt.s32.totalorder %s20, 1
          %s204 = scalar_select %p203, %s20, 1
          %s205 = smul.addr %s204, 2
          %s206 = smul.addr %s205, 4
          %s207 = scalar_lea.vmem %s1, %s206
        $region32: #{tpu_custom_call.1} parent=27 // pred_fallthru
          _
      $region28: #{tpu_custom_call.1} parent=5 // pred_fallthru
        _
      %p208 = scmp.le.s32.totalorder 1, %s12
      %p209 = scmp.lt.s32.totalorder %s12, 3
      %p210 = pnand %p208, %p209
      %p211 = pneg %p210
      // Predicated region
      $region33: #{tpu_custom_call.1} parent=5 // pred_check
        _
      $region34: #{tpu_custom_call.1} parent=5 // pred_check_branch
        %213 = sbr.rel (%p210) target = $region36
      $region35: #{tpu_custom_call.1} parent=5 // pred_region
        %s214 = ssub.s32 %s12, 1
        // Predicated region
        $region37: #{tpu_custom_call.1} parent=35 // pred_check
          %p215 = pneg %p50
        $region38: #{tpu_custom_call.1} parent=35 // pred_check_branch
          %217 = sbr.rel (%p215) target = $region40
        $region39: #{tpu_custom_call.1} parent=35 // pred_region
          %218 = dma.done [#allocation5], 128
        $region40: #{tpu_custom_call.1} parent=35 // pred_fallthru
          _
        %p219 = pneg %p50
        %p220 = pneg %p47
        %p221 = scmp.lt.s32.totalorder %s22, 1
        %s222 = scalar_select %p221, %s22, 1
        %s223 = smul.addr %s222, 2
        %s224 = smul.addr %s223, 4
        %s225 = scalar_lea.vmem %s1, %s224
        %p226 = pneg %p76
        %p227 = pneg %p73
        %p228 = scmp.lt.s32.totalorder %s21, 0
        %s229 = scalar_select %p228, %s21, 0
        %s230 = smul.addr %s229, 8
        %s231 = scalar_lea.vmem %s2, %s230
        %p232 = pneg %p102
        %p233 = pneg %p99
        %p234 = scmp.lt.s32.totalorder %s21, 0
        %s235 = scalar_select %p234, %s21, 0
        %s236 = smul.addr %s235, 8
        %s237 = scalar_lea.vmem %s3, %s236
        %p238 = pneg %p128
        %p239 = pneg %p125
        %p240 = pneg %p154
        %p241 = pneg %p151
        %p242 = scmp.lt.s32.totalorder %s22, 1
        %s243 = scalar_select %p242, %s22, 1
        %s244 = smul.addr %s243, 2
        %s245 = smul.addr %s244, 4
        %s246 = scalar_lea.vmem %s1, %s245
        %p247 = scmp.lt.s32.totalorder %s21, 0
        %s248 = scalar_select %p247, %s21, 0
        %s249 = smul.addr %s248, 8
        %s250 = scalar_lea.vmem %s2, %s249
        %p251 = scmp.lt.s32.totalorder %s21, 0
        %s252 = scalar_select %p251, %s21, 0
        %s253 = smul.addr %s252, 8
        %s254 = scalar_lea.vmem %s3, %s253
        %p255 = scmp.eq.s32.totalorder %s22, 0
        // Predicated region
        $region41: #{tpu_custom_call.1} parent=35 // pred_check
          %p256 = pneg %p255
        $region42: #{tpu_custom_call.1} parent=35 // pred_check_branch
          %258 = sbr.rel (%p256) target = $region44
        $region43: #{tpu_custom_call.1} parent=35 // pred_region
          %vm259 = vcmask 7168
          %260 = vst.msk [vmem:[#allocation2] sm:$0xff] %vm259, 0.0
          %261 = vst.msk [vmem:[#allocation3] sm:$0xff] %vm259, 0.0
        $region44: #{tpu_custom_call.1} parent=35 // pred_fallthru
          _
        %v262 = vld [vmem:[%s246] sm:$0xf]
        %v263 = vld [vmem:[%s246] sm:$0xff]
        %v265 = vcombine.low %v263, %v263
        %266 = vrot.lane.b32.xlu0 %v265, 127
        %v267 = vpop.permute.xlu0 %266
        %268 = vrot.lane.b32.xlu0 %v263, 127
        %v269 = vpop.permute.xlu0 %268
        %vm270 = vcmask 1039360
        %v271 = vsel %vm270, %v267, %v269
        %v273 = vcombine.high %v263, %v263
        %274 = vrot.lane.b32.xlu0 %v263, 126
        %v275 = vpop.permute.xlu0 %274
        %276 = vrot.lane.b32.xlu0 %v273, 126
        %v277 = vpop.permute.xlu0 %276
        %vm278 = vcmask 1031168
        %v279 = vsel %vm278, %v275, %v277
        %vm280 = vcmask 1043456
        %v281 = vsel %vm280, %v262, %v271
        %v282 = vld [vmem:[#allocation4] sm:$0xff]
        %vm283 = vcmask 97280
        %v285 = vsel %vm283, %v282, 0
        %v287 = vsel %vm280, %v279, 0
        %289 = vmatprep.subr.mxu0 0.0
        %290 = vmatpush1.msra.mxu0 %v281
        %291 = vmatprep.subr.mxu0 0.0
        %292 = vmatpush1.msra.mxu0 %v287
        %293 = vmatprep.subr.mxu0 0.0
        %294 = vmatpush1.msra.mxu0 0.0
        %295 = vmatprep.subr.mxu0 0.0
        %296 = vmatpush1.msra.mxu0 0.0
        %297 = vmatprep.subr.mxu0 0.0
        %298 = vmatpush1.msra.mxu0 0.0
        %299 = vmatprep.subr.mxu0 0.0
        %300 = vmatpush1.msra.mxu0 0.0
        %301 = vmatprep.subr.mxu0 0.0
        %302 = vmatpush1.msra.mxu0 0.0
        %303 = vmatprep.subr.mxu0 0.0
        %304 = vmatpush1.msra.mxu0 0.0
        %305 = vmatprep.subr.mxu0 0.0
        %306 = vmatpush1.msra.mxu0 0.0
        %307 = vmatprep.subr.mxu0 0.0
        %308 = vmatpush1.msra.mxu0 0.0
        %309 = vmatprep.subr.mxu0 0.0
        %310 = vmatpush1.msra.mxu0 0.0
        %311 = vmatprep.subr.mxu0 0.0
        %312 = vmatpush1.msra.mxu0 0.0
        %313 = vmatprep.subr.mxu0 0.0
        %314 = vmatpush1.msra.mxu0 0.0
        %315 = vmatprep.subr.mxu0 0.0
        %316 = vmatpush1.msra.mxu0 0.0
        %317 = vmatprep.subr.mxu0 0.0
        %318 = vmatpush1.msra.mxu0 0.0
        %319 = vmatprep.subr.mxu0 0.0
        %320 = vmatpush1.msra.mxu0 0.0
        %321 = vmatprep.subr.mxu0 0.0
        %322 = vmatpush1.msra.mxu0 0.0
        %323 = vmatprep.subr.mxu0 0.0
        %324 = vmatpush1.msra.mxu0 0.0
        %325 = vmatprep.subr.mxu0 0.0
        %326 = vmatpush1.msra.mxu0 0.0
        %327 = vmatprep.subr.mxu0 0.0
        %328 = vmatpush1.msra.mxu0 0.0
        %329 = vmatprep.subr.mxu0 0.0
        %330 = vmatpush1.msra.mxu0 0.0
        %331 = vmatprep.subr.mxu0 0.0
        %332 = vmatpush1.msra.mxu0 0.0
        %333 = vmatprep.subr.mxu0 0.0
        %334 = vmatpush1.msra.mxu0 0.0
        %335 = vmatprep.subr.mxu0 0.0
        %336 = vmatpush1.msra.mxu0 0.0
        %337 = vmatprep.subr.mxu0 0.0
        %338 = vmatpush1.msra.mxu0 0.0
        %339 = vmatprep.subr.mxu0 0.0
        %340 = vmatpush1.msra.mxu0 0.0
        %341 = vmatprep.subr.mxu0 0.0
        %342 = vmatpush1.msra.mxu0 0.0
        %343 = vmatprep.subr.mxu0 0.0
        %344 = vmatpush1.msra.mxu0 0.0
        %345 = vmatprep.subr.mxu0 0.0
        %346 = vmatpush1.msra.mxu0 0.0
        %347 = vmatprep.subr.mxu0 0.0
        %348 = vmatpush1.msra.mxu0 0.0
        %349 = vmatprep.subr.mxu0 0.0
        %350 = vmatpush1.msra.mxu0 0.0
        %351 = vmatprep.subr.mxu0 0.0
        %352 = vmatpush1.msra.mxu0 0.0
        %353 = vmatprep.mubr.f32.mxu0 0.0
        %354 = vmatmul.mubr.f32.gmra.mrb[0].mxu0 %v285
        %v355 = vpop.f32.mrb[0].mxu0
        %v356 = vadd.f32 0.0, %v355
        %v357 = vpop.f32.mrb[0].mxu0
        %358 = vdwg.mxu0
        %v359 = vlaneseq
        %v360 = vand.u32 %v359, 127
        %vm361 = vcmp.lt.s32.totalorder %v360, 16
        %v362 = vsel %vm361, 1, 0
        %vm363 = vcmp.eq.s32.totalorder %v362, 1
        %v364 = vsel %vm363, %v356, 0.0
        %v365 = vld [vmem:[#allocation2] sm:$0xff]
        %366 = vadd.xlane.f32.xlu0 %v364
        %v367 = vpop.xlane.xlu0 %366
        %v368 = vadd.f32 %v365, %v367
        %vm369 = vcmask 7168
        %370 = vst.msk [vmem:[#allocation2] sm:$0xff] %vm369, %v368
        %v371 = vld [vmem:[#allocation3] sm:$0xff]
        %v372 = vmul.f32 %v364, %v364
        %373 = vadd.xlane.f32.xlu0 %v372
        %v374 = vpop.xlane.xlu0 %373
        %v375 = vadd.f32 %v371, %v374
        %376 = vst.msk [vmem:[#allocation3] sm:$0xff] %vm369, %v375
        %s377 = smul.u32 %s22, 8
        %s378 = scalar_lea.vmem [#allocation7], %s377
        %379 = vst [vmem:[%s378] sm:$0xff] %v356
        %p380 = scmp.eq.s32.totalorder %s22, 1
        // Predicated region
        $region45: #{tpu_custom_call.1} parent=35 // pred_check
          %p381 = pneg %p380
        $region46: #{tpu_custom_call.1} parent=35 // pred_check_branch
          %383 = sbr.rel (%p381) target = $region48
        $region47: #{tpu_custom_call.1} parent=35 // pred_region
          %v384 = vld [vmem:[#allocation2] sm:$0xff]
          %v385 = vmul.f32 %v384, 0.03125
          %v386 = vld [vmem:[#allocation3] sm:$0xff]
          %v387 = vmul.f32 %v386, 0.03125
          %v388 = vmul.f32 %v385, %v385
          %v389 = vsub.f32 %v387, %v388
          %v390 = vld [vmem:[%s250] sm:$0xff]
          %v391 = vadd.f32 %v389, 1e-05
          %v392 = vrsqrt.pop %v391
          %v393 = vmul.f32 %v390, %v392
          %v394 = vld [vmem:[%s254] sm:$0xff]
          %v395 = vmul.f32 %v385, %v393
          %v396 = vsub.f32 %v394, %v395
          %v397 = vld [vmem:[#allocation7] sm:$0xff]
          %399 = vset.pattern.permute.xlu0 0
          %400 = vperm.xlu0 %399, %v393
          %v401 = vpop.permute.xlu0 %400
          %v403 = vmul.f32 %v397, %v401
          %405 = vset.pattern.permute.xlu0 0
          %406 = vperm.xlu0 %405, %v396
          %v407 = vpop.permute.xlu0 %406
          %v409 = vadd.f32 %v403, %v407
          %v410 = vmax.f32 %v409, 0.0
          %411 = vst [vmem:[#allocation7] sm:$0xff] %v410
          %s412 = scalar_lea.vmem [#allocation7], 8
          %v413 = vld [vmem:[%s412] sm:$0xff]
          %v414 = vmul.f32 %v413, %v401
          %v415 = vadd.f32 %v414, %v407
          %v416 = vmax.f32 %v415, 0.0
          %417 = vst [vmem:[%s412] sm:$0xff] %v416
        $region48: #{tpu_custom_call.1} parent=35 // pred_fallthru
          _
        // Predicated region
        $region49: #{tpu_custom_call.1} parent=35 // pred_check
          %p418 = pneg %p151
        $region50: #{tpu_custom_call.1} parent=35 // pred_check_branch
          %420 = sbr.rel (%p418) target = $region52
        $region51: #{tpu_custom_call.1} parent=35 // pred_region
          %s422 = ssub.s32 256, 256
          %423 = vsyncadd [#allocation6], %s422
          %s424 = smul.addr %s21, 128
          %s425 = scalar_lea.hbm %s4, %s424
          %s426 = sshll.u32 [#allocation7], 4
          %s427 = int_to_ptr.vmem [resolvable:$true] %s426
          %432 = dma.vmem_to_hbm [thread:$0]  %s427, 256, %s425, [#allocation6], 128, 128, 8
        $region52: #{tpu_custom_call.1} parent=35 // pred_fallthru
          _
        // Predicated region
        $region53: #{tpu_custom_call.1} parent=35 // pred_check
          %p433 = pneg %p151
        $region54: #{tpu_custom_call.1} parent=35 // pred_check_branch
          %435 = sbr.rel (%p433) target = $region56
        $region55: #{tpu_custom_call.1} parent=35 // pred_region
          %436 = dma.done [#allocation6], 256
        $region56: #{tpu_custom_call.1} parent=35 // pred_fallthru
          _
      $region36: #{tpu_custom_call.1} parent=5 // pred_fallthru
        _
      %p437 = scmp.le.s32.totalorder 2, %s12
      // Predicated region
      $region57: #{tpu_custom_call.1} parent=5 // pred_check
        %p438 = pneg %p437
      $region58: #{tpu_custom_call.1} parent=5 // pred_check_branch
        %440 = sbr.rel (%p438) target = $region60
      $region59: #{tpu_custom_call.1} parent=5 // pred_region
        %s441 = ssub.s32 %s12, 2
      $region60: #{tpu_custom_call.1} parent=5 // pred_fallthru
        _
    $region6: #{tpu_custom_call.1} parent=1 // loop_footer
      %s16 = sadd.s32 1, %s12
    $region7: #{tpu_custom_call.1} parent=1 // loop_footer_branch
      %11 = sbr.rel target = $region3
    $region8: #{tpu_custom_call.1} parent=1 // loop_exit
      _
    %442 = vsyncpa [#allocation5], 1
    %s443 = scalar_lea.sflag [#allocation5], 1
    %444 = vsyncpa %s443, 1
    %445 = vsyncpa [#allocation6], 1
    %s446 = scalar_lea.sflag [#allocation6], 1
    %447 = vsyncpa %s446, 1

</llo_original>
